<compile_context>
chip_gen: v5e
topology: v5e:2x2
jax: 0.10.0
libtpu: 0.0.40
codegen_flags: <defaults>
</compile_context>

<pallas_src>
import functools

import jax
import jax.numpy as jnp
from jax.experimental import pallas as pl
from jax.experimental.pallas import tpu as pltpu


FEAT_PAD = 128           # all feature widths padded to one lane-dense width
ROW_PAD = 256            # node-count padding granularity (decoupled from tiles)
TILE_ROWS_AGG = 256      # row tile for A_hat @ XW
TILE_ROWS_MLP = 512      # row tile for plain row-wise MLP / XW kernels


def _round_up(n, m):
    return ((n + m - 1) // m) * m


def _default_vmem_limit():
    try:
        cap = int(getattr(pltpu.get_tpu_info(), "vmem_capacity_bytes", 0) or 0)
    except Exception:
        cap = 0
    if cap <= 0:
        cap = 64 * 1024 * 1024    # conservative fallback: v7x physical VMEM
    return min(cap * 3 // 4, 112 * 1024 * 1024)


_VMEM_LIMIT = _default_vmem_limit()


def _pick_row_tile(n_rows, pref):
    t = min(pref, n_rows)
    while t > 128 and n_rows % t != 0:
        t //= 2
    return t if n_rows % t == 0 else n_rows


# ----------------------------------------------------------------------------
# Pallas kernels
# ----------------------------------------------------------------------------
def _apply_act(h, name):
    if name == "relu":
        return jnp.maximum(h, 0.0)
    if name == "leaky_relu":
        return jnp.where(h > 0, h, 0.01 * h)   # torch default slope 0.01
    return h


def _mlp_kernel(acts, x_ref, *refs):
    """Fused stack of Linear(+activation) layers on one row tile."""
    o_ref = refs[-1]
    wb = refs[:-1]
    h = x_ref[...].astype(jnp.float32)
    for li, act in enumerate(acts):
        w = wb[2 * li][...]
        b = wb[2 * li + 1][...]
        h = jnp.dot(h, w, preferred_element_type=jnp.float32) + b
        h = _apply_act(h, act)
    o_ref[...] = h.astype(o_ref.dtype)


def _community_mlp_kernel(x_ref, w1, b1, w2, b2, w3, b3, o_ref):
    """One community's 3-layer leaky-ReLU MLP; weight stacks stay VMEM-resident
    across the community grid and are indexed by program_id."""
    c = pl.program_id(0)
    h = x_ref[0].astype(jnp.float32)
    for w, b in ((w1, b1), (w2, b2), (w3, b3)):
        wl = w[c]                                   # (fp, fp) bf16
        h = jnp.dot(h.astype(wl.dtype), wl,
                    preferred_element_type=jnp.float32) + b[c]
        h = jnp.where(h > 0, h, 0.01 * h)
    o_ref[0] = h.astype(o_ref.dtype)


def _xw_kernel(x_ref, w_ref, o_ref):
    """Row tile of X @ W, stored lane-dense bf16 (layer 0 only)."""
    xw = jnp.dot(x_ref[...], w_ref[...], preferred_element_type=jnp.float32)
    o_ref[...] = xw.astype(o_ref.dtype)


def _gcn_fused_kernel(a_ref, xw_ref, b_ref, wn_ref, xwn_ref):
    """out = relu(A_hat @ XW + b); emit next layer's XW = out @ W_next (bf16).
    Single-pass contraction: a_ref is a full (tile_m, n_pad) row slab and
    xw_ref the full VMEM-resident (n_pad, fp) slab."""
    out = jnp.dot(a_ref[...], xw_ref[...], preferred_element_type=jnp.float32)
    out = jnp.maximum(out + b_ref[...], 0.0)
    xw_next = jnp.dot(out.astype(jnp.bfloat16),
                      wn_ref[...].astype(jnp.bfloat16),
                      preferred_element_type=jnp.float32)
    xwn_ref[...] = xw_next.astype(xwn_ref.dtype)


def _gcn_last_kernel(a_ref, xw_ref, b_ref, o_ref):
    """Final layer: out = A_hat @ XW + b (no ReLU), f32 output."""
    out = jnp.dot(a_ref[...], xw_ref[...], preferred_element_type=jnp.float32)
    o_ref[...] = (out + b_ref[...]).astype(o_ref.dtype)


# ----------------------------------------------------------------------------
# Pallas wrappers
# ----------------------------------------------------------------------------
def mlp_rowtile(x, layer_params, acts):
    """Fused MLP, row-tiled over the (padded) node axis."""
    n_rows, fp = x.shape
    tile = _pick_row_tile(n_rows, TILE_ROWS_MLP)
    flat = []
    in_specs = [pl.BlockSpec((tile, fp), lambda i: (i, 0))]
    for (w, b) in layer_params:
        flat += [w, b]
        in_specs += [pl.BlockSpec(w.shape, lambda i: (0, 0)),
                     pl.BlockSpec(b.shape, lambda i: (0, 0))]
    kernel = functools.partial(_mlp_kernel, tuple(acts))
    return pl.pallas_call(
        kernel,
        out_shape=jax.ShapeDtypeStruct((n_rows, fp), jnp.float32),
        grid=(n_rows // tile,),
        in_specs=in_specs,
        out_specs=pl.BlockSpec((tile, fp), lambda i: (i, 0)),
        compiler_params=pltpu.CompilerParams(
            dimension_semantics=("parallel",),
            vmem_limit_bytes=_VMEM_LIMIT),
    )(x, *flat)


def community_mlp(xc, fc1, fc2, fc3):
    """All communities' fc1/fc2/fc3 stacks in one pallas_call; weights resident."""
    num_local, rp, fp = xc.shape
    w1, b1 = fc1
    w2, b2 = fc2
    w3, b3 = fc3

    def row_spec(arr):
        return pl.BlockSpec((1,) + arr.shape[1:], lambda c: (c, 0, 0))

    def resident_spec(arr):
        return pl.BlockSpec(arr.shape, lambda c: (0, 0, 0))

    return pl.pallas_call(
        _community_mlp_kernel,
        out_shape=jax.ShapeDtypeStruct((num_local, rp, fp), jnp.float32),
        grid=(num_local,),
        in_specs=[row_spec(xc),
                  resident_spec(w1), resident_spec(b1),
                  resident_spec(w2), resident_spec(b2),
                  resident_spec(w3), resident_spec(b3)],
        out_specs=row_spec(xc),
        compiler_params=pltpu.CompilerParams(
            dimension_semantics=("parallel",),
            vmem_limit_bytes=_VMEM_LIMIT),
    )(xc, w1, b1, w2, b2, w3, b3)


def xw_rowtile(x, w_pad):
    """XW = X @ W (layer 0 only), row tiled, stored bf16 lane-dense."""
    n_rows, fin = x.shape
    fp = w_pad.shape[1]
    tile = _pick_row_tile(n_rows, TILE_ROWS_MLP)
    return pl.pallas_call(
        _xw_kernel,
        out_shape=jax.ShapeDtypeStruct((n_rows, fp), jnp.bfloat16),
        grid=(n_rows // tile,),
        in_specs=[pl.BlockSpec((tile, fin), lambda i: (i, 0)),
                  pl.BlockSpec((fin, fp), lambda i: (0, 0))],
        out_specs=pl.BlockSpec((tile, fp), lambda i: (i, 0)),
        compiler_params=pltpu.CompilerParams(
            dimension_semantics=("parallel",),
            vmem_limit_bytes=_VMEM_LIMIT),
        cost_estimate=pl.CostEstimate(
            flops=2 * n_rows * fin * fp, transcendentals=0,
            bytes_accessed=n_rows * fin * 4 + fin * fp * 4 + n_rows * fp * 2),
    )(x, w_pad)


def gcn_stack(a_pad_bf16, x_pad, convs_padded):
    """Full GCN stack. Each layer: single-pass A_hat @ XW + b (+ReLU);
    for all but the last layer, the next layer's XW is fused into the same
    kernel so intermediate activations never hit HBM."""
    n_pad, fp = x_pad.shape
    tile_m = _pick_row_tile(n_pad, TILE_ROWS_AGG)
    grid = (n_pad // tile_m,)

    a_spec = pl.BlockSpec((tile_m, n_pad), lambda i: (i, 0))     # row slab of A
    xw_spec = pl.BlockSpec((n_pad, fp), lambda i: (0, 0))        # VMEM resident
    b_spec = pl.BlockSpec((1, fp), lambda i: (0, 0))
    w_spec = pl.BlockSpec((fp, fp), lambda i: (0, 0))
    row_out = pl.BlockSpec((tile_m, fp), lambda i: (i, 0))
    cparams = pltpu.CompilerParams(
        dimension_semantics=("parallel",), vmem_limit_bytes=_VMEM_LIMIT)

    agg_flops = 2 * n_pad * n_pad * fp
    agg_bytes = n_pad * n_pad * 2 + n_pad * fp * 2 + fp * 4

    # Layer 0 XW, once.
    xw = xw_rowtile(x_pad, convs_padded[0][0])

    n_conv = len(convs_padded)
    out = None
    for li in range(n_conv):
        _, b = convs_padded[li]
        if li < n_conv - 1:
            w_next = convs_padded[li + 1][0]
            xw = pl.pallas_call(
                _gcn_fused_kernel,
                out_shape=jax.ShapeDtypeStruct((n_pad, fp), jnp.bfloat16),
                grid=grid,
                in_specs=[a_spec, xw_spec, b_spec, w_spec],
                out_specs=row_out,
                compiler_params=cparams,
                cost_estimate=pl.CostEstimate(
                    flops=agg_flops + 2 * n_pad * fp * fp,
                    transcendentals=0,
                    bytes_accessed=agg_bytes + fp * fp * 4 + n_pad * fp * 2),
            )(a_pad_bf16, xw, b, w_next)
        else:
            out = pl.pallas_call(
                _gcn_last_kernel,
                out_shape=jax.ShapeDtypeStruct((n_pad, fp), jnp.float32),
                grid=grid,
                in_specs=[a_spec, xw_spec, b_spec],
                out_specs=row_out,
                compiler_params=cparams,
                cost_estimate=pl.CostEstimate(
                    flops=agg_flops, transcendentals=0,
                    bytes_accessed=agg_bytes + n_pad * fp * 4),
            )(a_pad_bf16, xw, b)
    return out


# ----------------------------------------------------------------------------
# Parameter construction (matches module __init__ shapes) + 128-padding
# ----------------------------------------------------------------------------
def _init_linear(key, fan_in, fan_out):
    k1, k2 = jax.random.split(key)
    bound = 1.0 / jnp.sqrt(jnp.float32(fan_in))
    w = jax.random.uniform(k1, (fan_in, fan_out), jnp.float32, -bound, bound)
    b = jax.random.uniform(k2, (1, fan_out), jnp.float32, -bound, bound)
    return w, b


def init_hplc_params(key, in_channels, hidden_channels, out_channels,
                     num_layers, dim, num_local):
    keys = iter(jax.random.split(key, 64))
    params = {}
    d = 2 * dim - 1
    params["pos_embedding"] = [
        _init_linear(next(keys), d, d),
        _init_linear(next(keys), d, num_local),
    ]
    convs = [_init_linear(next(keys), in_channels, hidden_channels)]
    for _ in range(num_layers - 2):
        convs.append(_init_linear(next(keys), hidden_channels, hidden_channels))
    convs.append(_init_linear(next(keys), hidden_channels, out_channels))
    params["convs"] = convs
    params["fc1"] = [_init_linear(next(keys), in_channels, hidden_channels)
                     for _ in range(num_local)]
    params["fc2"] = [_init_linear(next(keys), hidden_channels, hidden_channels)
                     for _ in range(num_local)]
    params["fc3"] = [_init_linear(next(keys), hidden_channels, in_channels)
                     for _ in range(num_local)]
    return params


def _pad_linear(w, b, in_p, out_p):
    wp = jnp.zeros((in_p, out_p), jnp.float32).at[: w.shape[0], : w.shape[1]].set(w)
    bp = jnp.zeros((1, out_p), jnp.float32).at[:, : b.shape[1]].set(b)
    return wp, bp


def prepare_padded_params(params, fp=FEAT_PAD):
    """Zero-pad all weights/biases to [fp, fp]/[1, fp]; stack community MLPs
    (weights bf16 — they stay VMEM-resident across the community grid)."""
    pp = {}
    pp["pos_embedding"] = [_pad_linear(w, b, fp, fp)
                           for (w, b) in params["pos_embedding"]]
    pp["convs"] = [_pad_linear(w, b, fp, fp) for (w, b) in params["convs"]]
    for name in ("fc1", "fc2", "fc3"):
        ws, bs = [], []
        for (w, b) in params[name]:
            wp, bp = _pad_linear(w, b, fp, fp)
            ws.append(wp.astype(jnp.bfloat16))
            bs.append(bp)
        pp[name] = (jnp.stack(ws), jnp.stack(bs))
    return pp


# ----------------------------------------------------------------------------
# Forward pass (mirrors HPLC.forward, inference mode)
# ----------------------------------------------------------------------------
def hplc_forward(pp, x, a_pad_bf16, com_idx_pad, pos_emb, lap_pe, *,
                 n_nodes, feat, num_local, out_channels):
    fp = FEAT_PAD
    n_pad = a_pad_bf16.shape[0]
    n = n_nodes

    # pos_emb = pos_embedding(cat([pos_emb, lap_pe], -1))
    pe_in = jnp.concatenate([pos_emb, lap_pe], axis=-1)
    pe_in_p = jnp.zeros((n_pad, fp), jnp.float32).at[:n, : pe_in.shape[1]].set(pe_in)
    pe = mlp_rowtile(pe_in_p, pp["pos_embedding"], ("relu", "none"))

    # x = cat([x, pos_emb], -1), zero-padded to [n_pad, 128]
    x_pad = jnp.zeros((n_pad, fp), jnp.float32)
    x_pad = x_pad.at[:n, :feat].set(x)
    x_pad = x_pad.at[:n, feat:feat + num_local].set(pe[:n, :num_local])

    # per-community 3-layer MLPs, fused into one kernel (disjoint communities)
    xc = x_pad[jnp.clip(com_idx_pad, 0, n - 1)]               # [num_local, Rp, 128]
    yc = community_mlp(xc, pp["fc1"], pp["fc2"], pp["fc3"])
    x_pad = x_pad.at[com_idx_pad.reshape(-1)].set(
        yc.reshape(-1, fp), mode="drop")                      # OOB sentinel dropped

    # GCN stack (ReLU + dropout=identity on all but last, fused XW hand-off)
    out = gcn_stack(a_pad_bf16, x_pad, pp["convs"])
    return out[:n, :out_channels]


def normalized_adjacency(adj):
    """A_hat = D^-1/2 (A + I) D^-1/2 (dense, symmetric GCN normalization)."""
    n = adj.shape[0]
    a = adj + jnp.eye(n, dtype=adj.dtype)
    deg = jnp.sum(a, axis=1)
    d_inv_sqrt = 1.0 / jnp.sqrt(jnp.maximum(deg, 1e-12))
    return a * d_inv_sqrt[:, None] * d_inv_sqrt[None, :]


# ----------------------------------------------------------------------------
# Demo
# ----------------------------------------------------------------------------
if __name__ == "__main__":
    key = jax.random.PRNGKey(0)

    # Small, self-consistent shapes
    N = 64                 # number of nodes
    dim = 4                # pos_emb: [N, dim], lap_pe: [N, dim-1]
    num_local = 2
    feat = 6               # raw node feature width
    in_channels = feat + num_local
    hidden_channels = 16
    out_channels = 8
    num_layers = 3

    k_param, k_x, k_pe, k_lap, k_adj = jax.random.split(key, 5)
    params = init_hplc_params(k_param, in_channels, hidden_channels,
                              out_channels, num_layers, dim, num_local)
    padded = prepare_padded_params(params)

    x = jax.random.normal(k_x, (N, feat), jnp.float32)
    pos_emb = jax.random.normal(k_pe, (N, dim), jnp.float32)
    lap_pe = jax.random.normal(k_lap, (N, dim - 1), jnp.float32)

    # random symmetric adjacency -> dense normalized A_hat, padded + bf16
    a_rand = jax.random.bernoulli(k_adj, 0.1, (N, N)).astype(jnp.float32)
    adj = jnp.triu(a_rand, 1)
    adj = adj + adj.T
    Np = _round_up(N, ROW_PAD)                 # padding decoupled from tile size
    a_norm = normalized_adjacency(adj)
    a_pad = jnp.zeros((Np, Np), jnp.float32).at[:N, :N].set(a_norm)
    a_pad = a_pad.astype(jnp.bfloat16)

    # communities: disjoint partition of nodes; pad index lists to a common,
    # 8-aligned length using the out-of-bounds sentinel Np (dropped on scatter)
    com_xs = [
        jnp.arange(i * (N // num_local), (i + 1) * (N // num_local),
                   dtype=jnp.int32)
        for i in range(num_local)
    ]
    Rp = _round_up(max(int(c.shape[0]) for c in com_xs), 8)
    com_idx_pad = jnp.full((num_local, Rp), Np, dtype=jnp.int32)
    for i, c in enumerate(com_xs):
        com_idx_pad = com_idx_pad.at[i, : c.shape[0]].set(c)

    out = hplc_forward(padded, x, a_pad, com_idx_pad, pos_emb, lap_pe,
                       n_nodes=N, feat=feat, num_local=num_local,
                       out_channels=out_channels)
    out = jax.block_until_ready(out)
    assert out.shape == (N, out_channels), out.shape
    assert bool(jnp.all(jnp.isfinite(out)))
    print("KERNEL_OK")
</pallas_src>

<mosaic_0001>
module attributes {stable_mosaic.version = 11 : i64} {
  func.func @_mlp_kernel(%arg0: i32, %arg1: memref<256x128xf32, #tpu.memory_space<vmem>>, %arg2: memref<128x128xf32, #tpu.memory_space<vmem>>, %arg3: memref<1x128xf32, #tpu.memory_space<vmem>>, %arg4: memref<128x128xf32, #tpu.memory_space<vmem>>, %arg5: memref<1x128xf32, #tpu.memory_space<vmem>>, %arg6: memref<256x128xf32, #tpu.memory_space<vmem>>) attributes {dimension_semantics = [#tpu.dimension_semantics<parallel>], iteration_bounds = array<i64: 1>, scalar_prefetch = 0 : i64, scratch_operands = 0 : i64, tpu.core_type = #tpu.core_type<tc>, window_params = [{transform_indices = @transform_0, window_bounds = array<i64: 256, 128>}, {pipeline_mode = #tpu.pipeline_mode<synchronous>, transform_indices = @transform_1, window_bounds = array<i64: 128, 128>}, {pipeline_mode = #tpu.pipeline_mode<synchronous>, transform_indices = @transform_2, window_bounds = array<i64: 1, 128>}, {pipeline_mode = #tpu.pipeline_mode<synchronous>, transform_indices = @transform_3, window_bounds = array<i64: 128, 128>}, {pipeline_mode = #tpu.pipeline_mode<synchronous>, transform_indices = @transform_4, window_bounds = array<i64: 1, 128>}, {transform_indices = @transform_5, window_bounds = array<i64: 256, 128>}]} {
    %c0 = arith.constant 0 : index
    %c0_0 = arith.constant 0 : index
    %0 = vector.load %arg1[%c0, %c0_0] : memref<256x128xf32, #tpu.memory_space<vmem>>, vector<256x128xf32>
    %c0_1 = arith.constant 0 : index
    %c0_2 = arith.constant 0 : index
    %1 = vector.load %arg2[%c0_1, %c0_2] : memref<128x128xf32, #tpu.memory_space<vmem>>, vector<128x128xf32>
    %c0_3 = arith.constant 0 : index
    %c0_4 = arith.constant 0 : index
    %2 = vector.load %arg3[%c0_3, %c0_4] : memref<1x128xf32, #tpu.memory_space<vmem>>, vector<1x128xf32>
    %cst = arith.constant dense<0.000000e+00> : vector<256x128xf32>
    %3 = tpu.matmul %0, %1, %cst {dimension_numbers = #tpu.dot_dimension_numbers<[1], [0], [0], [1], [0, 0, 1, 1], [], []>} : vector<256x128xf32>, vector<128x128xf32>, vector<256x128xf32> -> vector<256x128xf32>
    %4 = vector.broadcast %2 : vector<1x128xf32> to vector<256x128xf32>
    %5 = arith.addf %3, %4 : vector<256x128xf32>
    %cst_5 = arith.constant 0.000000e+00 : f32
    %6 = vector.broadcast %cst_5 : f32 to vector<256x128xf32>
    %7 = arith.maximumf %5, %6 : vector<256x128xf32>
    %c0_6 = arith.constant 0 : index
    %c0_7 = arith.constant 0 : index
    %8 = vector.load %arg4[%c0_6, %c0_7] : memref<128x128xf32, #tpu.memory_space<vmem>>, vector<128x128xf32>
    %c0_8 = arith.constant 0 : index
    %c0_9 = arith.constant 0 : index
    %9 = vector.load %arg5[%c0_8, %c0_9] : memref<1x128xf32, #tpu.memory_space<vmem>>, vector<1x128xf32>
    %cst_10 = arith.constant dense<0.000000e+00> : vector<256x128xf32>
    %10 = tpu.matmul %7, %8, %cst_10 {dimension_numbers = #tpu.dot_dimension_numbers<[1], [0], [0], [1], [0, 0, 1, 1], [], []>} : vector<256x128xf32>, vector<128x128xf32>, vector<256x128xf32> -> vector<256x128xf32>
    %11 = vector.broadcast %9 : vector<1x128xf32> to vector<256x128xf32>
    %12 = arith.addf %10, %11 : vector<256x128xf32>
    %c0_11 = arith.constant 0 : index
    %c0_12 = arith.constant 0 : index
    %13 = vector.load %arg6[%c0_11, %c0_12] : memref<256x128xf32, #tpu.memory_space<vmem>>, vector<256x128xf32>
    tpu.vector_store %arg6[%c0_11, %c0_12], %12 {strides = array<i32>} : memref<256x128xf32, #tpu.memory_space<vmem>>, vector<256x128xf32>,
    return
  }
  func.func @transform_0(%arg0: i32) -> (i32, i32) {
    %c0_i32 = arith.constant 0 : i32
    %c0_i32_0 = arith.constant 0 : i32
    return %arg0, %c0_i32 : i32, i32
  }
  func.func @transform_1(%arg0: i32) -> (i32, i32) {
    %c0_i32 = arith.constant 0 : i32
    %c0_i32_0 = arith.constant 0 : i32
    %c0_i32_1 = arith.constant 0 : i32
    return %c0_i32, %c0_i32_0 : i32, i32
  }
  func.func @transform_2(%arg0: i32) -> (i32, i32) {
    %c0_i32 = arith.constant 0 : i32
    %c0_i32_0 = arith.constant 0 : i32
    %c0_i32_1 = arith.constant 0 : i32
    return %c0_i32, %c0_i32_0 : i32, i32
  }
  func.func @transform_3(%arg0: i32) -> (i32, i32) {
    %c0_i32 = arith.constant 0 : i32
    %c0_i32_0 = arith.constant 0 : i32
    %c0_i32_1 = arith.constant 0 : i32
    return %c0_i32, %c0_i32_0 : i32, i32
  }
  func.func @transform_4(%arg0: i32) -> (i32, i32) {
    %c0_i32 = arith.constant 0 : i32
    %c0_i32_0 = arith.constant 0 : i32
    %c0_i32_1 = arith.constant 0 : i32
    return %c0_i32, %c0_i32_0 : i32, i32
  }
  func.func @transform_5(%arg0: i32) -> (i32, i32) {
    %c0_i32 = arith.constant 0 : i32
    %c0_i32_0 = arith.constant 0 : i32
    return %arg0, %c0_i32 : i32, i32
  }
}

</mosaic_0001>

<llo_original>
// kernel: tpu_custom_call.1
$region0: #{tpu_custom_call.1}
  #allocation0 [shape = 'u32[]', space=smem, size = 0x4, offset = 0x4, fixed_abs, tag = 'smem constant byte address 0x4 - core index']
  #allocation1 [shape = 'u32[72,128]{1,0:T(1,128)}', space=vmem, size = 0x9000, scoped, tag = 'internal scratch']
  %s0 = inlined_call_operand.hbm [shape: f32[256,128], index: 0, kind: input, shape index: {}]
  %s1 = inlined_call_operand.hbm [shape: f32[128,128], index: 1, kind: input, shape index: {}]
  %s2 = inlined_call_operand.vmem [shape: f32[1,128], index: 2, kind: input, shape index: {}]
  %s3 = inlined_call_operand.hbm [shape: f32[128,128], index: 3, kind: input, shape index: {}]
  %s4 = inlined_call_operand.vmem [shape: f32[1,128], index: 4, kind: input, shape index: {}]
  %s5 = inlined_call_operand.hbm [shape: f32[256,128], index: 5, kind: output, shape index: {}]
  %s6 = sld [smem:[#allocation0]]
  $region42: #{tpu_custom_call.1} parent=0
    _
  %s8 = ssub.s32 1, %s6
  %s9 = scalar_select 0, %s8, %s6
  $region1: #{tpu_custom_call.1} parent=0
    #allocation2 [shape = 'u8[131072]{0}', space=vmem, size = 0x20000, scoped, tag = 'input window, operand 0, single buffered']
    #allocation3 [shape = 's32[1]{0}', space=sflag, size = 0x4, scoped, tag = 'scoped memory for tpu_custom_call.1']
    #allocation4 [shape = 's32[1]{0}', space=sflag, size = 0x4, scoped, tag = 'scoped memory for tpu_custom_call.1']
    #allocation5 [shape = 'u8[65536]{0}', space=vmem, size = 0x10000, scoped, tag = 'input window, operand 1, single buffered']
    #allocation6 [shape = 's32[1]{0}', space=sflag, size = 0x4, scoped, tag = 'scoped memory for tpu_custom_call.1']
    #allocation7 [shape = 'u8[65536]{0}', space=vmem, size = 0x10000, scoped, tag = 'input window, operand 3, single buffered']
    #allocation8 [shape = 'u8[131072]{0}', space=vmem, size = 0x20000, scoped, tag = 'output window, operand 0, single buffered']
    %10 = vsyncpa [#allocation3], 0
    %11 = vsyncpa [#allocation6], 0
    %12 = vsyncpa [#allocation4], 0
    // Predicated region
    $region2: #{tpu_custom_call.1} parent=1 // pred_check
      _
    $region3: #{tpu_custom_call.1} parent=1 // pred_check_branch
      %14 = sbr.rel (0) target = $region5
    $region4: #{tpu_custom_call.1} parent=1 // pred_region
      %16 = vsyncadd [#allocation3], 0
      %s17 = sshll.u32 %s0, 4
      %s18 = int_to_ptr.hbm [resolvable:$true] %s17
      %s19 = sshll.u32 [#allocation2], 4
      %s20 = int_to_ptr.vmem [resolvable:$true] %s19
      %25 = dma.hbm_to_vmem [thread:$0]  %s18, 4096, %s20, [#allocation3], 128, 128, 8
    $region5: #{tpu_custom_call.1} parent=1 // pred_fallthru
      _
    // Predicated region
    $region6: #{tpu_custom_call.1} parent=1 // pred_check
      _
    $region7: #{tpu_custom_call.1} parent=1 // pred_check_branch
      %27 = sbr.rel (0) target = $region9
    $region8: #{tpu_custom_call.1} parent=1 // pred_region
      %29 = vsyncadd [#allocation6], 0
      %s30 = sshll.u32 %s1, 4
      %s31 = int_to_ptr.hbm [resolvable:$true] %s30
      %s32 = sshll.u32 [#allocation5], 4
      %s33 = int_to_ptr.vmem [resolvable:$true] %s32
      %38 = dma.hbm_to_vmem [thread:$0]  %s31, 2048, %s33, [#allocation6], 128, 128, 8
    $region9: #{tpu_custom_call.1} parent=1 // pred_fallthru
      _
    // Predicated region
    $region10: #{tpu_custom_call.1} parent=1 // pred_check
      _
    $region11: #{tpu_custom_call.1} parent=1 // pred_check_branch
      %40 = sbr.rel (0) target = $region13
    $region12: #{tpu_custom_call.1} parent=1 // pred_region
      _
    $region13: #{tpu_custom_call.1} parent=1 // pred_fallthru
      _
    // Predicated region
    $region14: #{tpu_custom_call.1} parent=1 // pred_check
      _
    $region15: #{tpu_custom_call.1} parent=1 // pred_check_branch
      %42 = sbr.rel (0) target = $region17
    $region16: #{tpu_custom_call.1} parent=1 // pred_region
      %44 = vsyncadd [#allocation6], 0
      %s45 = sshll.u32 %s3, 4
      %s46 = int_to_ptr.hbm [resolvable:$true] %s45
      %s47 = sshll.u32 [#allocation7], 4
      %s48 = int_to_ptr.vmem [resolvable:$true] %s47
      %53 = dma.hbm_to_vmem [thread:$0]  %s46, 2048, %s48, [#allocation6], 128, 128, 8
    $region17: #{tpu_custom_call.1} parent=1 // pred_fallthru
      _
    // Predicated region
    $region18: #{tpu_custom_call.1} parent=1 // pred_check
      _
    $region19: #{tpu_custom_call.1} parent=1 // pred_check_branch
      %55 = sbr.rel (0) target = $region21
    $region20: #{tpu_custom_call.1} parent=1 // pred_region
      _
    $region21: #{tpu_custom_call.1} parent=1 // pred_fallthru
      _
    // Predicated region
    $region22: #{tpu_custom_call.1} parent=1 // pred_check
      _
    $region23: #{tpu_custom_call.1} parent=1 // pred_check_branch
      %57 = sbr.rel (0) target = $region25
    $region24: #{tpu_custom_call.1} parent=1 // pred_region
      %59 = dma.done [#allocation3], 4096
    $region25: #{tpu_custom_call.1} parent=1 // pred_fallthru
      _
    // Predicated region
    $region26: #{tpu_custom_call.1} parent=1 // pred_check
      _
    $region27: #{tpu_custom_call.1} parent=1 // pred_check_branch
      %61 = sbr.rel (0) target = $region29
    $region28: #{tpu_custom_call.1} parent=1 // pred_region
      %63 = dma.done [#allocation6], 2048
    $region29: #{tpu_custom_call.1} parent=1 // pred_fallthru
      _
    // Predicated region
    $region30: #{tpu_custom_call.1} parent=1 // pred_check
      _
    $region31: #{tpu_custom_call.1} parent=1 // pred_check_branch
      %65 = sbr.rel (0) target = $region33
    $region32: #{tpu_custom_call.1} parent=1 // pred_region
      %67 = dma.done [#allocation6], 2048
    $region33: #{tpu_custom_call.1} parent=1 // pred_fallthru
      _
    %v68 = vld [vmem:[#allocation2] sm:$0xff]
    %v69 = vld [vmem:[#allocation2 + $0x8] sm:$0xff]
    %v70 = vld [vmem:[#allocation2 + $0x10] sm:$0xff]
    %v71 = vld [vmem:[#allocation2 + $0x18] sm:$0xff]
    %v72 = vld [vmem:[#allocation2 + $0x20] sm:$0xff]
    %v73 = vld [vmem:[#allocation2 + $0x28] sm:$0xff]
    %v74 = vld [vmem:[#allocation2 + $0x30] sm:$0xff]
    %v75 = vld [vmem:[#allocation2 + $0x38] sm:$0xff]
    %v76 = vld [vmem:[#allocation2 + $0x40] sm:$0xff]
    %v77 = vld [vmem:[#allocation2 + $0x48] sm:$0xff]
    %v78 = vld [vmem:[#allocation2 + $0x50] sm:$0xff]
    %v79 = vld [vmem:[#allocation2 + $0x58] sm:$0xff]
    %v80 = vld [vmem:[#allocation2 + $0x60] sm:$0xff]
    %v81 = vld [vmem:[#allocation2 + $0x68] sm:$0xff]
    %v82 = vld [vmem:[#allocation2 + $0x70] sm:$0xff]
    %v83 = vld [vmem:[#allocation2 + $0x78] sm:$0xff]
    %v84 = vld [vmem:[#allocation2 + $0x80] sm:$0xff]
    %v85 = vld [vmem:[#allocation2 + $0x88] sm:$0xff]
    %v86 = vld [vmem:[#allocation2 + $0x90] sm:$0xff]
    %v87 = vld [vmem:[#allocation2 + $0x98] sm:$0xff]
    %v88 = vld [vmem:[#allocation2 + $0xa0] sm:$0xff]
    %v89 = vld [vmem:[#allocation2 + $0xa8] sm:$0xff]
    %v90 = vld [vmem:[#allocation2 + $0xb0] sm:$0xff]
    %v91 = vld [vmem:[#allocation2 + $0xb8] sm:$0xff]
    %v92 = vld [vmem:[#allocation2 + $0xc0] sm:$0xff]
    %v93 = vld [vmem:[#allocation2 + $0xc8] sm:$0xff]
    %v94 = vld [vmem:[#allocation2 + $0xd0] sm:$0xff]
    %v95 = vld [vmem:[#allocation2 + $0xd8] sm:$0xff]
    %v96 = vld [vmem:[#allocation2 + $0xe0] sm:$0xff]
    %v97 = vld [vmem:[#allocation2 + $0xe8] sm:$0xff]
    %v98 = vld [vmem:[#allocation2 + $0xf0] sm:$0xff]
    %v99 = vld [vmem:[#allocation2 + $0xf8] sm:$0xff]
    %v100 = vld [vmem:[#allocation5] sm:$0xff]
    %v101 = vld [vmem:[#allocation5 + $0x8] sm:$0xff]
    %v102 = vld [vmem:[#allocation5 + $0x10] sm:$0xff]
    %v103 = vld [vmem:[#allocation5 + $0x18] sm:$0xff]
    %v104 = vld [vmem:[#allocation5 + $0x20] sm:$0xff]
    %v105 = vld [vmem:[#allocation5 + $0x28] sm:$0xff]
    %v106 = vld [vmem:[#allocation5 + $0x30] sm:$0xff]
    %v107 = vld [vmem:[#allocation5 + $0x38] sm:$0xff]
    %v108 = vld [vmem:[#allocation5 + $0x40] sm:$0xff]
    %v109 = vld [vmem:[#allocation5 + $0x48] sm:$0xff]
    %v110 = vld [vmem:[#allocation5 + $0x50] sm:$0xff]
    %v111 = vld [vmem:[#allocation5 + $0x58] sm:$0xff]
    %v112 = vld [vmem:[#allocation5 + $0x60] sm:$0xff]
    %v113 = vld [vmem:[#allocation5 + $0x68] sm:$0xff]
    %v114 = vld [vmem:[#allocation5 + $0x70] sm:$0xff]
    %v115 = vld [vmem:[#allocation5 + $0x78] sm:$0xff]
    %v116 = vld [vmem:[%s2] sm:$0x1]
    %v118 = vperm.slane %v116, 0
    %120 = vmatpush.msra.mxu0 %v115
    %121 = vmatpush.msra.mxu0 %v114
    %122 = vmatpush.msra.mxu0 %v113
    %123 = vmatpush.msra.mxu0 %v112
    %124 = vmatpush.msra.mxu0 %v111
    %125 = vmatpush.msra.mxu0 %v110
    %126 = vmatpush.msra.mxu0 %v109
    %127 = vmatpush.msra.mxu0 %v108
    %128 = vmatpush.msra.mxu0 %v107
    %129 = vmatpush.msra.mxu0 %v106
    %130 = vmatpush.msra.mxu0 %v105
    %131 = vmatpush.msra.mxu0 %v104
    %132 = vmatpush.msra.mxu0 %v103
    %133 = vmatpush.msra.mxu0 %v102
    %134 = vmatpush.msra.mxu0 %v101
    %135 = vmatpush.msra.mxu0 %v100
    %136 = vmatmul.f32.gmra.mxu0 %v68
    %v137 = vpop.f32.mrf.mxu0
    %v138 = vadd.f32 %v118, %v137
    %139 = vmatmul.f32.gmra.mxu0 %v69
    %v140 = vpop.f32.mrf.mxu0
    %v141 = vadd.f32 %v118, %v140
    %142 = vmatmul.f32.gmra.mxu0 %v70
    %v143 = vpop.f32.mrf.mxu0
    %v144 = vadd.f32 %v118, %v143
    %145 = vmatmul.f32.gmra.mxu0 %v71
    %v146 = vpop.f32.mrf.mxu0
    %v147 = vadd.f32 %v118, %v146
    %148 = vmatmul.f32.gmra.mxu0 %v72
    %v149 = vpop.f32.mrf.mxu0
    %v150 = vadd.f32 %v118, %v149
    %151 = vmatmul.f32.gmra.mxu0 %v73
    %v152 = vpop.f32.mrf.mxu0
    %v153 = vadd.f32 %v118, %v152
    %154 = vmatmul.f32.gmra.mxu0 %v74
    %v155 = vpop.f32.mrf.mxu0
    %v156 = vadd.f32 %v118, %v155
    %157 = vmatmul.f32.gmra.mxu0 %v75
    %v158 = vpop.f32.mrf.mxu0
    %v159 = vadd.f32 %v118, %v158
    %160 = vmatmul.f32.gmra.mxu0 %v76
    %v161 = vpop.f32.mrf.mxu0
    %v162 = vadd.f32 %v118, %v161
    %163 = vmatmul.f32.gmra.mxu0 %v77
    %v164 = vpop.f32.mrf.mxu0
    %v165 = vadd.f32 %v118, %v164
    %166 = vmatmul.f32.gmra.mxu0 %v78
    %v167 = vpop.f32.mrf.mxu0
    %v168 = vadd.f32 %v118, %v167
    %169 = vmatmul.f32.gmra.mxu0 %v79
    %v170 = vpop.f32.mrf.mxu0
    %v171 = vadd.f32 %v118, %v170
    %172 = vmatmul.f32.gmra.mxu0 %v80
    %v173 = vpop.f32.mrf.mxu0
    %v174 = vadd.f32 %v118, %v173
    %175 = vmatmul.f32.gmra.mxu0 %v81
    %v176 = vpop.f32.mrf.mxu0
    %v177 = vadd.f32 %v118, %v176
    %178 = vmatmul.f32.gmra.mxu0 %v82
    %v179 = vpop.f32.mrf.mxu0
    %v180 = vadd.f32 %v118, %v179
    %181 = vmatmul.f32.gmra.mxu0 %v83
    %v182 = vpop.f32.mrf.mxu0
    %v183 = vadd.f32 %v118, %v182
    %184 = vmatmul.f32.gmra.mxu0 %v84
    %v185 = vpop.f32.mrf.mxu0
    %v186 = vadd.f32 %v118, %v185
    %187 = vmatmul.f32.gmra.mxu0 %v85
    %v188 = vpop.f32.mrf.mxu0
    %v189 = vadd.f32 %v118, %v188
    %190 = vmatmul.f32.gmra.mxu0 %v86
    %v191 = vpop.f32.mrf.mxu0
    %v192 = vadd.f32 %v118, %v191
    %193 = vmatmul.f32.gmra.mxu0 %v87
    %v194 = vpop.f32.mrf.mxu0
    %v195 = vadd.f32 %v118, %v194
    %196 = vmatmul.f32.gmra.mxu0 %v88
    %v197 = vpop.f32.mrf.mxu0
    %v198 = vadd.f32 %v118, %v197
    %199 = vmatmul.f32.gmra.mxu0 %v89
    %v200 = vpop.f32.mrf.mxu0
    %v201 = vadd.f32 %v118, %v200
    %202 = vmatmul.f32.gmra.mxu0 %v90
    %v203 = vpop.f32.mrf.mxu0
    %v204 = vadd.f32 %v118, %v203
    %205 = vmatmul.f32.gmra.mxu0 %v91
    %v206 = vpop.f32.mrf.mxu0
    %v207 = vadd.f32 %v118, %v206
    %208 = vmatmul.f32.gmra.mxu0 %v92
    %v209 = vpop.f32.mrf.mxu0
    %v210 = vadd.f32 %v118, %v209
    %211 = vmatmul.f32.gmra.mxu0 %v93
    %v212 = vpop.f32.mrf.mxu0
    %v213 = vadd.f32 %v118, %v212
    %214 = vmatmul.f32.gmra.mxu0 %v94
    %v215 = vpop.f32.mrf.mxu0
    %v216 = vadd.f32 %v118, %v215
    %217 = vmatmul.f32.gmra.mxu0 %v95
    %v218 = vpop.f32.mrf.mxu0
    %v219 = vadd.f32 %v118, %v218
    %220 = vmatmul.f32.gmra.mxu0 %v96
    %v221 = vpop.f32.mrf.mxu0
    %v222 = vadd.f32 %v118, %v221
    %223 = vmatmul.f32.gmra.mxu0 %v97
    %v224 = vpop.f32.mrf.mxu0
    %v225 = vadd.f32 %v118, %v224
    %226 = vmatmul.f32.gmra.mxu0 %v98
    %v227 = vpop.f32.mrf.mxu0
    %v228 = vadd.f32 %v118, %v227
    %229 = vmatmul.f32.gmra.mxu0 %v99
    %v230 = vpop.f32.mrf.mxu0
    %v231 = vadd.f32 %v118, %v230
    %232 = vdwg.mxu0
    %v233 = vmax.f32 %v138, 0.0
    %v234 = vmax.f32 %v141, 0.0
    %v235 = vmax.f32 %v144, 0.0
    %v236 = vmax.f32 %v147, 0.0
    %v237 = vmax.f32 %v150, 0.0
    %v238 = vmax.f32 %v153, 0.0
    %v239 = vmax.f32 %v156, 0.0
    %v240 = vmax.f32 %v159, 0.0
    %v241 = vmax.f32 %v162, 0.0
    %v242 = vmax.f32 %v165, 0.0
    %v243 = vmax.f32 %v168, 0.0
    %v244 = vmax.f32 %v171, 0.0
    %v245 = vmax.f32 %v174, 0.0
    %v246 = vmax.f32 %v177, 0.0
    %v247 = vmax.f32 %v180, 0.0
    %v248 = vmax.f32 %v183, 0.0
    %v249 = vmax.f32 %v186, 0.0
    %v250 = vmax.f32 %v189, 0.0
    %v251 = vmax.f32 %v192, 0.0
    %v252 = vmax.f32 %v195, 0.0
    %v253 = vmax.f32 %v198, 0.0
    %v254 = vmax.f32 %v201, 0.0
    %v255 = vmax.f32 %v204, 0.0
    %v256 = vmax.f32 %v207, 0.0
    %v257 = vmax.f32 %v210, 0.0
    %v258 = vmax.f32 %v213, 0.0
    %v259 = vmax.f32 %v216, 0.0
    %v260 = vmax.f32 %v219, 0.0
    %v261 = vmax.f32 %v222, 0.0
    %v262 = vmax.f32 %v225, 0.0
    %v263 = vmax.f32 %v228, 0.0
    %v264 = vmax.f32 %v231, 0.0
    %v265 = vld [vmem:[#allocation7] sm:$0xff]
    %v266 = vld [vmem:[#allocation7 + $0x8] sm:$0xff]
    %v267 = vld [vmem:[#allocation7 + $0x10] sm:$0xff]
    %v268 = vld [vmem:[#allocation7 + $0x18] sm:$0xff]
    %v269 = vld [vmem:[#allocation7 + $0x20] sm:$0xff]
    %v270 = vld [vmem:[#allocation7 + $0x28] sm:$0xff]
    %v271 = vld [vmem:[#allocation7 + $0x30] sm:$0xff]
    %v272 = vld [vmem:[#allocation7 + $0x38] sm:$0xff]
    %v273 = vld [vmem:[#allocation7 + $0x40] sm:$0xff]
    %v274 = vld [vmem:[#allocation7 + $0x48] sm:$0xff]
    %v275 = vld [vmem:[#allocation7 + $0x50] sm:$0xff]
    %v276 = vld [vmem:[#allocation7 + $0x58] sm:$0xff]
    %v277 = vld [vmem:[#allocation7 + $0x60] sm:$0xff]
    %v278 = vld [vmem:[#allocation7 + $0x68] sm:$0xff]
    %v279 = vld [vmem:[#allocation7 + $0x70] sm:$0xff]
    %v280 = vld [vmem:[#allocation7 + $0x78] sm:$0xff]
    %v281 = vld [vmem:[%s4] sm:$0x1]
    %v283 = vperm.slane %v281, 0
    %285 = vmatpush.msra.mxu0 %v280
    %286 = vmatpush.msra.mxu0 %v279
    %287 = vmatpush.msra.mxu0 %v278
    %288 = vmatpush.msra.mxu0 %v277
    %289 = vmatpush.msra.mxu0 %v276
    %290 = vmatpush.msra.mxu0 %v275
    %291 = vmatpush.msra.mxu0 %v274
    %292 = vmatpush.msra.mxu0 %v273
    %293 = vmatpush.msra.mxu0 %v272
    %294 = vmatpush.msra.mxu0 %v271
    %295 = vmatpush.msra.mxu0 %v270
    %296 = vmatpush.msra.mxu0 %v269
    %297 = vmatpush.msra.mxu0 %v268
    %298 = vmatpush.msra.mxu0 %v267
    %299 = vmatpush.msra.mxu0 %v266
    %300 = vmatpush.msra.mxu0 %v265
    %301 = vmatmul.f32.gmra.mxu0 %v233
    %v302 = vpop.f32.mrf.mxu0
    %v303 = vadd.f32 %v283, %v302
    %304 = vmatmul.f32.gmra.mxu0 %v234
    %v305 = vpop.f32.mrf.mxu0
    %v306 = vadd.f32 %v283, %v305
    %307 = vmatmul.f32.gmra.mxu0 %v235
    %v308 = vpop.f32.mrf.mxu0
    %v309 = vadd.f32 %v283, %v308
    %310 = vmatmul.f32.gmra.mxu0 %v236
    %v311 = vpop.f32.mrf.mxu0
    %v312 = vadd.f32 %v283, %v311
    %313 = vmatmul.f32.gmra.mxu0 %v237
    %v314 = vpop.f32.mrf.mxu0
    %v315 = vadd.f32 %v283, %v314
    %316 = vmatmul.f32.gmra.mxu0 %v238
    %v317 = vpop.f32.mrf.mxu0
    %v318 = vadd.f32 %v283, %v317
    %319 = vmatmul.f32.gmra.mxu0 %v239
    %v320 = vpop.f32.mrf.mxu0
    %v321 = vadd.f32 %v283, %v320
    %322 = vmatmul.f32.gmra.mxu0 %v240
    %v323 = vpop.f32.mrf.mxu0
    %v324 = vadd.f32 %v283, %v323
    %325 = vmatmul.f32.gmra.mxu0 %v241
    %v326 = vpop.f32.mrf.mxu0
    %v327 = vadd.f32 %v283, %v326
    %328 = vmatmul.f32.gmra.mxu0 %v242
    %v329 = vpop.f32.mrf.mxu0
    %v330 = vadd.f32 %v283, %v329
    %331 = vmatmul.f32.gmra.mxu0 %v243
    %v332 = vpop.f32.mrf.mxu0
    %v333 = vadd.f32 %v283, %v332
    %334 = vmatmul.f32.gmra.mxu0 %v244
    %v335 = vpop.f32.mrf.mxu0
    %v336 = vadd.f32 %v283, %v335
    %337 = vmatmul.f32.gmra.mxu0 %v245
    %v338 = vpop.f32.mrf.mxu0
    %v339 = vadd.f32 %v283, %v338
    %340 = vmatmul.f32.gmra.mxu0 %v246
    %v341 = vpop.f32.mrf.mxu0
    %v342 = vadd.f32 %v283, %v341
    %343 = vmatmul.f32.gmra.mxu0 %v247
    %v344 = vpop.f32.mrf.mxu0
    %v345 = vadd.f32 %v283, %v344
    %346 = vmatmul.f32.gmra.mxu0 %v248
    %v347 = vpop.f32.mrf.mxu0
    %v348 = vadd.f32 %v283, %v347
    %349 = vmatmul.f32.gmra.mxu0 %v249
    %v350 = vpop.f32.mrf.mxu0
    %v351 = vadd.f32 %v283, %v350
    %352 = vmatmul.f32.gmra.mxu0 %v250
    %v353 = vpop.f32.mrf.mxu0
    %v354 = vadd.f32 %v283, %v353
    %355 = vmatmul.f32.gmra.mxu0 %v251
    %v356 = vpop.f32.mrf.mxu0
    %v357 = vadd.f32 %v283, %v356
    %358 = vmatmul.f32.gmra.mxu0 %v252
    %v359 = vpop.f32.mrf.mxu0
    %v360 = vadd.f32 %v283, %v359
    %361 = vmatmul.f32.gmra.mxu0 %v253
    %v362 = vpop.f32.mrf.mxu0
    %v363 = vadd.f32 %v283, %v362
    %364 = vmatmul.f32.gmra.mxu0 %v254
    %v365 = vpop.f32.mrf.mxu0
    %v366 = vadd.f32 %v283, %v365
    %367 = vmatmul.f32.gmra.mxu0 %v255
    %v368 = vpop.f32.mrf.mxu0
    %v369 = vadd.f32 %v283, %v368
    %370 = vmatmul.f32.gmra.mxu0 %v256
    %v371 = vpop.f32.mrf.mxu0
    %v372 = vadd.f32 %v283, %v371
    %373 = vmatmul.f32.gmra.mxu0 %v257
    %v374 = vpop.f32.mrf.mxu0
    %v375 = vadd.f32 %v283, %v374
    %376 = vmatmul.f32.gmra.mxu0 %v258
    %v377 = vpop.f32.mrf.mxu0
    %v378 = vadd.f32 %v283, %v377
    %379 = vmatmul.f32.gmra.mxu0 %v259
    %v380 = vpop.f32.mrf.mxu0
    %v381 = vadd.f32 %v283, %v380
    %382 = vmatmul.f32.gmra.mxu0 %v260
    %v383 = vpop.f32.mrf.mxu0
    %v384 = vadd.f32 %v283, %v383
    %385 = vmatmul.f32.gmra.mxu0 %v261
    %v386 = vpop.f32.mrf.mxu0
    %v387 = vadd.f32 %v283, %v386
    %388 = vmatmul.f32.gmra.mxu0 %v262
    %v389 = vpop.f32.mrf.mxu0
    %v390 = vadd.f32 %v283, %v389
    %391 = vmatmul.f32.gmra.mxu0 %v263
    %v392 = vpop.f32.mrf.mxu0
    %v393 = vadd.f32 %v283, %v392
    %394 = vmatmul.f32.gmra.mxu0 %v264
    %v395 = vpop.f32.mrf.mxu0
    %v396 = vadd.f32 %v283, %v395
    %397 = vdwg.mxu0
    %398 = vst [vmem:[#allocation8] sm:$0xff] %v303
    %399 = vst [vmem:[#allocation8 + $0x8] sm:$0xff] %v306
    %400 = vst [vmem:[#allocation8 + $0x10] sm:$0xff] %v309
    %401 = vst [vmem:[#allocation8 + $0x18] sm:$0xff] %v312
    %402 = vst [vmem:[#allocation8 + $0x20] sm:$0xff] %v315
    %403 = vst [vmem:[#allocation8 + $0x28] sm:$0xff] %v318
    %404 = vst [vmem:[#allocation8 + $0x30] sm:$0xff] %v321
    %405 = vst [vmem:[#allocation8 + $0x38] sm:$0xff] %v324
    %406 = vst [vmem:[#allocation8 + $0x40] sm:$0xff] %v327
    %407 = vst [vmem:[#allocation8 + $0x48] sm:$0xff] %v330
    %408 = vst [vmem:[#allocation8 + $0x50] sm:$0xff] %v333
    %409 = vst [vmem:[#allocation8 + $0x58] sm:$0xff] %v336
    %410 = vst [vmem:[#allocation8 + $0x60] sm:$0xff] %v339
    %411 = vst [vmem:[#allocation8 + $0x68] sm:$0xff] %v342
    %412 = vst [vmem:[#allocation8 + $0x70] sm:$0xff] %v345
    %413 = vst [vmem:[#allocation8 + $0x78] sm:$0xff] %v348
    %414 = vst [vmem:[#allocation8 + $0x80] sm:$0xff] %v351
    %415 = vst [vmem:[#allocation8 + $0x88] sm:$0xff] %v354
    %416 = vst [vmem:[#allocation8 + $0x90] sm:$0xff] %v357
    %417 = vst [vmem:[#allocation8 + $0x98] sm:$0xff] %v360
    %418 = vst [vmem:[#allocation8 + $0xa0] sm:$0xff] %v363
    %419 = vst [vmem:[#allocation8 + $0xa8] sm:$0xff] %v366
    %420 = vst [vmem:[#allocation8 + $0xb0] sm:$0xff] %v369
    %421 = vst [vmem:[#allocation8 + $0xb8] sm:$0xff] %v372
    %422 = vst [vmem:[#allocation8 + $0xc0] sm:$0xff] %v375
    %423 = vst [vmem:[#allocation8 + $0xc8] sm:$0xff] %v378
    %424 = vst [vmem:[#allocation8 + $0xd0] sm:$0xff] %v381
    %425 = vst [vmem:[#allocation8 + $0xd8] sm:$0xff] %v384
    %426 = vst [vmem:[#allocation8 + $0xe0] sm:$0xff] %v387
    %427 = vst [vmem:[#allocation8 + $0xe8] sm:$0xff] %v390
    %428 = vst [vmem:[#allocation8 + $0xf0] sm:$0xff] %v393
    %429 = vst [vmem:[#allocation8 + $0xf8] sm:$0xff] %v396
    // Predicated region
    $region34: #{tpu_custom_call.1} parent=1 // pred_check
      _
    $region35: #{tpu_custom_call.1} parent=1 // pred_check_branch
      %431 = sbr.rel (0) target = $region37
    $region36: #{tpu_custom_call.1} parent=1 // pred_region
      %433 = vsyncadd [#allocation4], 0
      %s434 = sshll.u32 [#allocation8], 4
      %s435 = int_to_ptr.vmem [resolvable:$true] %s434
      %s436 = sshll.u32 %s5, 4
      %s437 = int_to_ptr.hbm [resolvable:$true] %s436
      %442 = dma.vmem_to_hbm [thread:$0]  %s435, 4096, %s437, [#allocation4], 128, 128, 8
    $region37: #{tpu_custom_call.1} parent=1 // pred_fallthru
      _
    // Predicated region
    $region38: #{tpu_custom_call.1} parent=1 // pred_check
      _
    $region39: #{tpu_custom_call.1} parent=1 // pred_check_branch
      %444 = sbr.rel (0) target = $region41
    $region40: #{tpu_custom_call.1} parent=1 // pred_region
      %446 = dma.done [#allocation4], 4096
    $region41: #{tpu_custom_call.1} parent=1 // pred_fallthru
      _
    %447 = vsyncpa [#allocation3], 1
    %448 = vsyncpa [#allocation6], 1
    %449 = vsyncpa [#allocation4], 1

</llo_original>
